<compile_context>
chip_gen: v7x
topology: tpu7x:2x2x1
jax: 0.10.0
libtpu: 0.0.40
codegen_flags: <defaults>
</compile_context>

<pallas_src>
import jax
import jax.numpy as jnp
from jax import lax
from jax.experimental import pallas as pl
from jax.experimental.pallas import tpu as pltpu

STABILITY = 0.999999
EPS = 1e-8
_EPS2 = EPS * EPS
_STAB2 = STABILITY * STABILITY

_VMEM_BUDGET = 24 * 1024 * 1024       # budget used to clamp the dense tile rows
_W_RESIDENT_BYTES = 4 * 1024 * 1024   # keep weight fully resident below this
_VMEM_LIMIT = 48 * 1024 * 1024        # explicit scoped-VMEM limit (safe on v7x)

# Abramowitz & Stegun 4.4.45 minimax approximation of arccos on [0, 1],
# |error| <= 2e-8 (below f32 resolution).  Used because Mosaic has no
# guaranteed lowering for arccos/atan2.
_ACOS_COEFFS = (1.5707963050, -0.2145988016, 0.0889789874, -0.0501743046,
                0.0308918810, -0.0170881256, 0.0066700901, -0.0012624911)


def _acos(x):
    a = jnp.abs(x)
    p = jnp.float32(_ACOS_COEFFS[-1])
    for c in _ACOS_COEFFS[-2::-1]:
        p = p * a + jnp.float32(c)
    r = jnp.sqrt(jnp.maximum(1.0 - a, 0.0)) * p
    return jnp.where(x < 0, jnp.float32(jnp.pi) - r, r)


# --------------------------- dense (aligned) path ---------------------------
def _make_dense_kernel(weight_mode, block_rows, bps, num_blocks, valid_pixels,
                       needs_mask):
    """Kernel body for the P % 128 == 0 layout. Static config closed over."""

    def body(x_ref, t_ref, w_ref, out_ref, acc_ref):
        p = pl.program_id(1)
        s = pl.program_id(2)
        g = p * bps + s                      # global spatial block index

        @pl.when(s == 0)
        def _():
            acc_ref[...] = jnp.zeros_like(acc_ref)

        x = x_ref[0].astype(jnp.float32)     # (C, R, 128) dense vregs
        t = t_ref[0].astype(jnp.float32)

        # Channel reductions over the small leading dim: pure VPU adds.
        xx = jnp.sum(x * x, axis=0)          # (R, 128)
        tt = jnp.sum(t * t, axis=0)
        xt = jnp.sum(x * t, axis=0)

        # cos = <x,t> / (max(|x|,EPS)*max(|t|,EPS)) * STABILITY^2; single rsqrt.
        inv = lax.rsqrt(jnp.maximum(xx, _EPS2) * jnp.maximum(tt, _EPS2))
        cos = (xt * _STAB2) * inv

        err = _acos(cos)
        contrib = err * err

        if weight_mode == "resident":
            if num_blocks == 1:
                wt = w_ref[...]
            else:
                row0 = pl.multiple_of(g * block_rows, 8)
                wt = w_ref[pl.ds(row0, block_rows), :]
            contrib = contrib * wt.astype(jnp.float32)
        elif weight_mode == "streamed":
            contrib = contrib * w_ref[...].astype(jnp.float32)

        if needs_mask:
            # Only the last global block contains padded / OOB rows.
            @pl.when(g != num_blocks - 1)
            def _():
                acc_ref[...] += contrib

            @pl.when(g == num_blocks - 1)
            def _():
                rows = g * block_rows + lax.broadcasted_iota(
                    jnp.int32, (block_rows, 128), 0)
                pix = rows * 128 + lax.broadcasted_iota(
                    jnp.int32, (block_rows, 128), 1)
                # select (not multiply): OOB rows may contain NaN garbage.
                acc_ref[...] += jnp.where(pix < valid_pixels, contrib, 0.0)
        else:
            acc_ref[...] += contrib

        @pl.when(s == bps - 1)
        def _():
            out_ref[0, 0] = jnp.sum(acc_ref[...], axis=0, keepdims=True)  # (1,128)

    if weight_mode == "none":
        def kernel(x_ref, t_ref, out_ref, acc_ref):
            body(x_ref, t_ref, None, out_ref, acc_ref)
    else:
        def kernel(x_ref, t_ref, w_ref, out_ref, acc_ref):
            body(x_ref, t_ref, w_ref, out_ref, acc_ref)
    return kernel


def _square_angular_loss_dense(x, t, w, block_rows):
    N, C, D, H, W = x.shape
    P = D * H * W
    S = P // 128

    x2 = x.reshape(N, C, S, 128)             # free: P % 128 == 0
    t2 = t.reshape(N, C, S, 128)

    # Tile rows: the largest multiple of 8 that fits the VMEM budget (or full S).
    block_rows = max(8, (int(block_rows) // 8) * 8)
    itm = x.dtype.itemsize
    per_row = 2 * 2 * C * 128 * itm + 128 * 4   # x+t double-buffered + f32 acc
    r_cap = max(8, ((_VMEM_BUDGET // per_row) // 8) * 8)
    R = min(block_rows, r_cap)
    if R >= S:
        R = S                                 # full-extent block (any size ok)
    num_blocks = (S + R - 1) // R
    needs_mask = (num_blocks * R * 128) != P

    # Optional 2-way split of the spatial axis so both v7x TensorCores stay
    # busy when N alone cannot shard evenly (no effect on 1-TC v5e/v6e).
    # TODO(synk): generalize to n_split > 2 / non-divisible block counts.
    n_split = 2 if (N % 2 == 1 and num_blocks >= 2 and num_blocks % 2 == 0) else 1
    bps = num_blocks // n_split

    args = [x2, t2]
    in_specs = [
        pl.BlockSpec((1, C, R, 128), lambda n, p, s: (n, 0, p * bps + s, 0)),
        pl.BlockSpec((1, C, R, 128), lambda n, p, s: (n, 0, p * bps + s, 0)),
    ]

    if w is None:
        weight_mode = "none"
    else:
        assert w.shape == (D, H, W), "weights must be a 3D (D, H, W) tensor"
        w_rows = num_blocks * R
        w2 = w.reshape(S, 128)                # free reshape
        if w_rows != S:
            # Tiny pad of the (small) weight plane only, so every weight read
            # (resident slice or streamed block) stays in bounds.
            w2 = jnp.pad(w2, ((0, w_rows - S), (0, 0)))
        resident = (w_rows * 128 * w2.dtype.itemsize) <= _W_RESIDENT_BYTES
        weight_mode = "resident" if resident else "streamed"
        args.append(w2)
        if resident:
            # Constant block index -> DMA'd exactly once, reused for all (n,p,s).
            in_specs.append(pl.BlockSpec((w_rows, 128), lambda n, p, s: (0, 0)))
        else:
            # TODO(synk): cast very large weight volumes to bf16 host-side to
            # halve their stream.
            in_specs.append(
                pl.BlockSpec((R, 128), lambda n, p, s: (p * bps + s, 0)))

    kernel = _make_dense_kernel(weight_mode, R, bps, num_blocks, P, needs_mask)

    partials = pl.pallas_call(
        kernel,
        out_shape=jax.ShapeDtypeStruct((N, n_split, 1, 128), jnp.float32),
        grid_spec=pltpu.PrefetchScalarGridSpec(
            num_scalar_prefetch=0,
            grid=(N, n_split, bps),
            in_specs=in_specs,
            out_specs=pl.BlockSpec((1, 1, 1, 128), lambda n, p, s: (n, p, 0, 0)),
            scratch_shapes=[pltpu.VMEM((R, 128), jnp.float32)],
        ),
        compiler_params=pltpu.CompilerParams(
            dimension_semantics=("parallel", "parallel", "arbitrary"),
            vmem_limit_bytes=_VMEM_LIMIT),
    )(*args)

    return jnp.sum(partials)


# --------------------------- ragged (no-pad) path ----------------------------
def _make_ragged_kernel(has_weight, block_cols, num_blocks, valid_pixels):
    """Kernel body for P % 128 != 0: (C, L) tiles, no host-side pad copy."""

    def body(x_ref, t_ref, w_ref, out_ref):
        s = pl.program_id(1)

        @pl.when(s == 0)
        def _():
            out_ref[...] = jnp.zeros_like(out_ref)

        x = x_ref[0].astype(jnp.float32)      # (C, L)
        t = t_ref[0].astype(jnp.float32)
        xx = jnp.sum(x * x, axis=0, keepdims=True)   # (1, L)
        tt = jnp.sum(t * t, axis=0, keepdims=True)
        xt = jnp.sum(x * t, axis=0, keepdims=True)
        inv = lax.rsqrt(jnp.maximum(xx, _EPS2) * jnp.maximum(tt, _EPS2))
        cos = (xt * _STAB2) * inv
        err = _acos(cos)
        contrib = err * err
        if has_weight:
            contrib = contrib * w_ref[...].astype(jnp.float32)

        @pl.when(s != num_blocks - 1)
        def _():
            out_ref[0] = out_ref[0] + contrib

        @pl.when(s == num_blocks - 1)
        def _():
            pix = s * block_cols + lax.broadcasted_iota(
                jnp.int32, (1, block_cols), 1)
            # select (not multiply): out-of-range lanes may be NaN garbage.
            out_ref[0] = out_ref[0] + jnp.where(pix < valid_pixels, contrib, 0.0)

    if has_weight:
        def kernel(x_ref, t_ref, w_ref, out_ref):
            body(x_ref, t_ref, w_ref, out_ref)
    else:
        def kernel(x_ref, t_ref, out_ref):
            body(x_ref, t_ref, None, out_ref)
    return kernel


def _square_angular_loss_ragged(x, t, w, block_cols=512):
    N, C, D, H, W = x.shape
    P = D * H * W

    lanes_needed = (P + 127) // 128
    L = 128 * min(lanes_needed, int(block_cols))
    num_blocks = (P + L - 1) // L

    x2 = x.reshape(N, C, P)                   # free reshape, no pad copy
    t2 = t.reshape(N, C, P)

    args = [x2, t2]
    in_specs = [
        pl.BlockSpec((1, C, L), lambda n, s: (n, 0, s)),
        pl.BlockSpec((1, C, L), lambda n, s: (n, 0, s)),
    ]
    has_weight = w is not None
    if has_weight:
        assert w.shape == (D, H, W), "weights must be a 3D (D, H, W) tensor"
        args.append(w.reshape(1, P))          # free reshape
        in_specs.append(pl.BlockSpec((1, L), lambda n, s: (0, s)))

    kernel = _make_ragged_kernel(has_weight, L, num_blocks, P)

    partials = pl.pallas_call(
        kernel,
        out_shape=jax.ShapeDtypeStruct((N, 1, L), jnp.float32),
        grid_spec=pltpu.PrefetchScalarGridSpec(
            num_scalar_prefetch=0,
            grid=(N, num_blocks),
            in_specs=in_specs,
            out_specs=pl.BlockSpec((1, 1, L), lambda n, s: (n, 0, 0)),
        ),
        compiler_params=pltpu.CompilerParams(
            dimension_semantics=("parallel", "arbitrary"),
            vmem_limit_bytes=_VMEM_LIMIT),
    )(*args)

    return jnp.sum(partials)


# --------------------------------- wrapper -----------------------------------
def square_angular_loss_pallas(x, t, w=None, *, block_rows=2048):
    """Pallas equivalent of `square_angular_loss`.

    x, t: (N, C, D, H, W) direction fields (f32 or bf16); w: (D, H, W) or None.
    Returns the scalar weighted sum of squared angular errors.
    """
    assert x.shape == t.shape and x.ndim == 5
    P = x.shape[2] * x.shape[3] * x.shape[4]
    if P % 128 == 0:
        return _square_angular_loss_dense(x, t, w, block_rows)
    return _square_angular_loss_ragged(x, t, w)


class TagsAngularLoss:
    """JAX/Pallas equivalent of the PyTorch TagsAngularLoss module."""

    def __init__(self, tags_coefficients):
        self.tags_coefficients = tags_coefficients

    def __call__(self, inputs, targets, weight):
        assert isinstance(inputs, list)
        if len(inputs) == 1:
            targets = [targets]
        assert len(inputs) == len(targets) == len(self.tags_coefficients)
        # TODO(synk): fusing the per-tag loop into one pallas_call would need a
        # host-side jnp.stack (a full copy of every field); left per-tag to keep
        # HBM traffic minimal.
        loss = jnp.float32(0.0)
        for inp, tgt, alpha in zip(inputs, targets, self.tags_coefficients):
            loss = loss + alpha * square_angular_loss_pallas(inp, tgt, weight)
        return loss


# ---------------- pure-JAX reference (for correctness check) ----------------
def _ref_square_angular_loss(x, t, w):
    xn = x / jnp.maximum(jnp.linalg.norm(x, axis=1, keepdims=True), EPS) * STABILITY
    tn = t / jnp.maximum(jnp.linalg.norm(t, axis=1, keepdims=True), EPS) * STABILITY
    cos = jnp.sum(xn * tn, axis=1)            # (N, D, H, W)
    err = jnp.arccos(cos)
    if w is None:
        return jnp.sum(err * err)
    return jnp.sum(err * err * w)             # w broadcasts (D,H,W)->(N,D,H,W)


def _ref_tags_angular_loss(inputs, targets, weight, coeffs):
    loss = 0.0
    for inp, tgt, a in zip(inputs, targets, coeffs):
        loss = loss + a * _ref_square_angular_loss(inp, tgt, weight)
    return loss


if __name__ == "__main__":
    key = jax.random.PRNGKey(0)
    k = jax.random.split(key, 12)

    # --- main case: module call signature (dense path, P = 512) --------------
    N, C, D, H, W = 2, 3, 4, 8, 16
    inputs = [jax.random.normal(k[0], (N, C, D, H, W), jnp.float32),
              jax.random.normal(k[1], (N, C, D, H, W), jnp.float32)]
    targets = [jax.random.normal(k[2], (N, C, D, H, W), jnp.float32),
               jax.random.normal(k[3], (N, C, D, H, W), jnp.float32)]
    weight = jax.random.uniform(k[4], (D, H, W), jnp.float32)
    coeffs = [1.0, 0.5]

    loss = jax.block_until_ready(TagsAngularLoss(coeffs)(inputs, targets, weight))
    ref = _ref_tags_angular_loss(inputs, targets, weight, coeffs)
    assert jnp.isfinite(loss), f"non-finite loss: {loss}"
    assert jnp.allclose(loss, ref, rtol=1e-4, atol=1e-4), (loss, ref)

    # --- unweighted variant (no weight stream) --------------------------------
    l_nw = jax.block_until_ready(square_angular_loss_pallas(inputs[0], targets[0], None))
    r_nw = _ref_square_angular_loss(inputs[0], targets[0], None)
    assert jnp.allclose(l_nw, r_nw, rtol=1e-4, atol=1e-4), (l_nw, r_nw)

    # --- ragged spatial size (D*H*W % 128 != 0): no-pad fallback path ---------
    Dr, Hr, Wr = 3, 5, 7
    xr = jax.random.normal(k[5], (1, C, Dr, Hr, Wr), jnp.float32)
    tr = jax.random.normal(k[6], (1, C, Dr, Hr, Wr), jnp.float32)
    wr = jax.random.uniform(k[7], (Dr, Hr, Wr), jnp.float32)
    for wgt in (wr, None):
        l_r = jax.block_until_ready(square_angular_loss_pallas(xr, tr, wgt))
        r_r = _ref_square_angular_loss(xr, tr, wgt)
        assert jnp.allclose(l_r, r_r, rtol=1e-4, atol=1e-4), (wgt is None, l_r, r_r)

    # --- multi-step dense grid (accumulator reset/flush across s) -------------
    Dm, Hm, Wm = 8, 16, 16
    xm = jax.random.normal(k[8], (N, C, Dm, Hm, Wm), jnp.float32)
    tm = jax.random.normal(k[9], (N, C, Dm, Hm, Wm), jnp.float32)
    wm = jax.random.uniform(k[10], (Dm, Hm, Wm), jnp.float32)
    l_m = jax.block_until_ready(square_angular_loss_pallas(xm, tm, wm, block_rows=8))
    r_m = _ref_square_angular_loss(xm, tm, wm)
    assert jnp.allclose(l_m, r_m, rtol=1e-4, atol=1e-4), (l_m, r_m)

    # --- 2-way spatial split (N = 1 -> both v7x TensorCores) ------------------
    xs, ts = xm[:1], tm[:1]
    for wgt in (wm, None):
        l_s = jax.block_until_ready(square_angular_loss_pallas(xs, ts, wgt, block_rows=8))
        r_s = _ref_square_angular_loss(xs, ts, wgt)
        assert jnp.allclose(l_s, r_s, rtol=1e-4, atol=1e-4), (wgt is None, l_s, r_s)

    # --- partial last row-block (dense masked path), without and with split ---
    Dp, Hp, Wp = 3, 4, 128          # P = 1536, S = 12 -> 2 blocks of 8 rows
    wp = jax.random.uniform(k[4], (Dp, Hp, Wp), jnp.float32)
    for n_test in (2, 1):           # n=2: no split; n=1: split + mask together
        xp = jax.random.normal(k[5], (n_test, C, Dp, Hp, Wp), jnp.float32)
        tp = jax.random.normal(k[6], (n_test, C, Dp, Hp, Wp), jnp.float32)
        for wgt in (wp, None):
            l_p = jax.block_until_ready(
                square_angular_loss_pallas(xp, tp, wgt, block_rows=8))
            r_p = _ref_square_angular_loss(xp, tp, wgt)
            assert jnp.allclose(l_p, r_p, rtol=1e-4, atol=1e-4), (
                n_test, wgt is None, l_p, r_p)

    print("KERNEL_OK")
</pallas_src>

<mosaic_0001>
module attributes {stable_mosaic.version = 11 : i64} {
  func.func @kernel(%arg0: i32, %arg1: i32, %arg2: i32, %arg3: memref<1x3x4x128xf32, #tpu.memory_space<vmem>>, %arg4: memref<1x3x4x128xf32, #tpu.memory_space<vmem>>, %arg5: memref<4x128xf32, #tpu.memory_space<vmem>>, %arg6: memref<1x1x1x128xf32, #tpu.memory_space<vmem>>, %arg7: memref<4x128xf32, #tpu.memory_space<vmem>>) attributes {dimension_semantics = [#tpu.dimension_semantics<parallel>, #tpu.dimension_semantics<parallel>, #tpu.dimension_semantics<arbitrary>], iteration_bounds = array<i64: 2, 1, 1>, scalar_prefetch = 0 : i64, scratch_operands = 1 : i64, tpu.core_type = #tpu.core_type<tc>, window_params = [{transform_indices = @transform_0, window_bounds = array<i64: 1, 3, 4, 128>}, {transform_indices = @transform_1, window_bounds = array<i64: 1, 3, 4, 128>}, {pipeline_mode = #tpu.pipeline_mode<synchronous>, transform_indices = @transform_2, window_bounds = array<i64: 4, 128>}, {transform_indices = @transform_3, window_bounds = array<i64: 1, 1, 1, 128>}]} {
    %c0_i32 = arith.constant 0 : i32
    %0 = arith.cmpi eq, %arg2, %c0_i32 : i32
    %1 = arith.extui %0 : i1 to i32
    %c0_i32_0 = arith.constant 0 : i32
    %2 = arith.cmpi ne, %1, %c0_i32_0 : i32
    scf.if %2 {
      %cst_33 = arith.constant 0.000000e+00 : f32
      %65 = vector.broadcast %cst_33 : f32 to vector<4x128xf32>
      %c0_34 = arith.constant 0 : index
      %c0_35 = arith.constant 0 : index
      %66 = vector.load %arg7[%c0_34, %c0_35] : memref<4x128xf32, #tpu.memory_space<vmem>>, vector<4x128xf32>
      tpu.vector_store %arg7[%c0_34, %c0_35], %65 {strides = array<i32>} : memref<4x128xf32, #tpu.memory_space<vmem>>, vector<4x128xf32>,
    } else {
    }
    %c0 = arith.constant 0 : index
    %c0_1 = arith.constant 0 : index
    %c0_2 = arith.constant 0 : index
    %c0_3 = arith.constant 0 : index
    %3 = vector.load %arg3[%c0, %c0_1, %c0_2, %c0_3] : memref<1x3x4x128xf32, #tpu.memory_space<vmem>>, vector<1x3x4x128xf32>
    %4 = vector.shape_cast %3 : vector<1x3x4x128xf32> to vector<3x4x128xf32>
    %c0_4 = arith.constant 0 : index
    %c0_5 = arith.constant 0 : index
    %c0_6 = arith.constant 0 : index
    %c0_7 = arith.constant 0 : index
    %5 = vector.load %arg4[%c0_4, %c0_5, %c0_6, %c0_7] : memref<1x3x4x128xf32, #tpu.memory_space<vmem>>, vector<1x3x4x128xf32>
    %6 = vector.shape_cast %5 : vector<1x3x4x128xf32> to vector<3x4x128xf32>
    %7 = arith.mulf %4, %4 : vector<3x4x128xf32>
    %cst = arith.constant dense<0.000000e+00> : vector<4x128xf32>
    %8 = vector.multi_reduction <add>, %7, %cst [0] : vector<3x4x128xf32> to vector<4x128xf32>
    %9 = arith.mulf %6, %6 : vector<3x4x128xf32>
    %cst_8 = arith.constant dense<0.000000e+00> : vector<4x128xf32>
    %10 = vector.multi_reduction <add>, %9, %cst_8 [0] : vector<3x4x128xf32> to vector<4x128xf32>
    %11 = arith.mulf %4, %6 : vector<3x4x128xf32>
    %cst_9 = arith.constant dense<0.000000e+00> : vector<4x128xf32>
    %12 = vector.multi_reduction <add>, %11, %cst_9 [0] : vector<3x4x128xf32> to vector<4x128xf32>
    %cst_10 = arith.constant 1.000000e-16 : f32
    %13 = vector.broadcast %cst_10 : f32 to vector<4x128xf32>
    %14 = arith.maximumf %8, %13 : vector<4x128xf32>
    %cst_11 = arith.constant 1.000000e-16 : f32
    %15 = vector.broadcast %cst_11 : f32 to vector<4x128xf32>
    %16 = arith.maximumf %10, %15 : vector<4x128xf32>
    %17 = arith.mulf %14, %16 : vector<4x128xf32>
    %18 = math.rsqrt %17 : vector<4x128xf32>
    %cst_12 = arith.constant 0.999997973 : f32
    %19 = vector.broadcast %cst_12 : f32 to vector<4x128xf32>
    %20 = arith.mulf %12, %19 : vector<4x128xf32>
    %21 = arith.mulf %20, %18 : vector<4x128xf32>
    %22 = math.absf %21 : vector<4x128xf32>
    %cst_13 = arith.constant -0.0012624911 : f32
    %23 = vector.broadcast %cst_13 : f32 to vector<4x128xf32>
    %24 = arith.mulf %23, %22 : vector<4x128xf32>
    %cst_14 = arith.constant 6.670090e-03 : f32
    %25 = vector.broadcast %cst_14 : f32 to vector<4x128xf32>
    %26 = arith.addf %24, %25 : vector<4x128xf32>
    %27 = arith.mulf %26, %22 : vector<4x128xf32>
    %cst_15 = arith.constant -0.0170881264 : f32
    %28 = vector.broadcast %cst_15 : f32 to vector<4x128xf32>
    %29 = arith.addf %27, %28 : vector<4x128xf32>
    %30 = arith.mulf %29, %22 : vector<4x128xf32>
    %cst_16 = arith.constant 0.0308918804 : f32
    %31 = vector.broadcast %cst_16 : f32 to vector<4x128xf32>
    %32 = arith.addf %30, %31 : vector<4x128xf32>
    %33 = arith.mulf %32, %22 : vector<4x128xf32>
    %cst_17 = arith.constant -0.0501743034 : f32
    %34 = vector.broadcast %cst_17 : f32 to vector<4x128xf32>
    %35 = arith.addf %33, %34 : vector<4x128xf32>
    %36 = arith.mulf %35, %22 : vector<4x128xf32>
    %cst_18 = arith.constant 0.0889789909 : f32
    %37 = vector.broadcast %cst_18 : f32 to vector<4x128xf32>
    %38 = arith.addf %36, %37 : vector<4x128xf32>
    %39 = arith.mulf %38, %22 : vector<4x128xf32>
    %cst_19 = arith.constant -0.214598805 : f32
    %40 = vector.broadcast %cst_19 : f32 to vector<4x128xf32>
    %41 = arith.addf %39, %40 : vector<4x128xf32>
    %42 = arith.mulf %41, %22 : vector<4x128xf32>
    %cst_20 = arith.constant 1.57079625 : f32
    %43 = vector.broadcast %cst_20 : f32 to vector<4x128xf32>
    %44 = arith.addf %42, %43 : vector<4x128xf32>
    %cst_21 = arith.constant 1.000000e+00 : f32
    %45 = vector.broadcast %cst_21 : f32 to vector<4x128xf32>
    %46 = arith.subf %45, %22 : vector<4x128xf32>
    %cst_22 = arith.constant 0.000000e+00 : f32
    %47 = vector.broadcast %cst_22 : f32 to vector<4x128xf32>
    %48 = arith.maximumf %46, %47 : vector<4x128xf32>
    %49 = math.sqrt %48 : vector<4x128xf32>
    %50 = arith.mulf %49, %44 : vector<4x128xf32>
    %cst_23 = arith.constant 0.000000e+00 : f32
    %51 = vector.broadcast %cst_23 : f32 to vector<4x128xf32>
    %52 = arith.cmpf olt, %21, %51 : vector<4x128xf32>
    %cst_24 = arith.constant 3.14159274 : f32
    %53 = vector.broadcast %cst_24 : f32 to vector<4x128xf32>
    %54 = arith.subf %53, %50 : vector<4x128xf32>
    %55 = arith.select %52, %54, %50 : vector<4x128xi1>, vector<4x128xf32>
    %56 = arith.mulf %55, %55 : vector<4x128xf32>
    %c0_25 = arith.constant 0 : index
    %c0_26 = arith.constant 0 : index
    %57 = vector.load %arg5[%c0_25, %c0_26] : memref<4x128xf32, #tpu.memory_space<vmem>>, vector<4x128xf32>
    %58 = arith.mulf %56, %57 : vector<4x128xf32>
    %c0_27 = arith.constant 0 : index
    %c0_28 = arith.constant 0 : index
    %59 = vector.load %arg7[%c0_27, %c0_28] : memref<4x128xf32, #tpu.memory_space<vmem>>, vector<4x128xf32>
    %60 = arith.addf %59, %58 : vector<4x128xf32>
    %c0_29 = arith.constant 0 : index
    %c0_30 = arith.constant 0 : index
    %61 = vector.load %arg7[%c0_29, %c0_30] : memref<4x128xf32, #tpu.memory_space<vmem>>, vector<4x128xf32>
    tpu.vector_store %arg7[%c0_29, %c0_30], %60 {strides = array<i32>} : memref<4x128xf32, #tpu.memory_space<vmem>>, vector<4x128xf32>,
    %c0_i32_31 = arith.constant 0 : i32
    %62 = arith.cmpi eq, %arg2, %c0_i32_31 : i32
    %63 = arith.extui %62 : i1 to i32
    %c0_i32_32 = arith.constant 0 : i32
    %64 = arith.cmpi ne, %63, %c0_i32_32 : i32
    scf.if %64 {
      %c0_33 = arith.constant 0 : index
      %c0_34 = arith.constant 0 : index
      %65 = vector.load %arg7[%c0_33, %c0_34] : memref<4x128xf32, #tpu.memory_space<vmem>>, vector<4x128xf32>
      %cst_35 = arith.constant dense<0.000000e+00> : vector<128xf32>
      %66 = vector.multi_reduction <add>, %65, %cst_35 [0] : vector<4x128xf32> to vector<128xf32>
      %67 = vector.shape_cast %66 : vector<128xf32> to vector<1x128xf32>
      %c0_36 = arith.constant 0 : index
      %c0_37 = arith.constant 0 : index
      %c0_38 = arith.constant 0 : index
      %c0_39 = arith.constant 0 : index
      %68 = vector.load %arg6[%c0_36, %c0_37, %c0_38, %c0_39] : memref<1x1x1x128xf32, #tpu.memory_space<vmem>>, vector<1x1x1x128xf32>
      %69 = vector.shape_cast %68 : vector<1x1x1x128xf32> to vector<1x128xf32>
      %70 = vector.shape_cast %67 : vector<1x128xf32> to vector<1x1x1x128xf32>
      tpu.vector_store %arg6[%c0_36, %c0_37, %c0_38, %c0_39], %70 {strides = array<i32>} : memref<1x1x1x128xf32, #tpu.memory_space<vmem>>, vector<1x1x1x128xf32>,
    } else {
    }
    return
  }
  func.func @transform_0(%arg0: i32, %arg1: i32, %arg2: i32) -> (i32, i32, i32, i32) {
    %c1_i32 = arith.constant 1 : i32
    %0 = arith.muli %arg1, %c1_i32 : i32
    %1 = arith.addi %0, %arg2 : i32
    %c0_i32 = arith.constant 0 : i32
    %c0_i32_0 = arith.constant 0 : i32
    %c0_i32_1 = arith.constant 0 : i32
    return %arg0, %c0_i32, %1, %c0_i32_0 : i32, i32, i32, i32
  }
  func.func @transform_1(%arg0: i32, %arg1: i32, %arg2: i32) -> (i32, i32, i32, i32) {
    %c1_i32 = arith.constant 1 : i32
    %0 = arith.muli %arg1, %c1_i32 : i32
    %1 = arith.addi %0, %arg2 : i32
    %c0_i32 = arith.constant 0 : i32
    %c0_i32_0 = arith.constant 0 : i32
    %c0_i32_1 = arith.constant 0 : i32
    return %arg0, %c0_i32, %1, %c0_i32_0 : i32, i32, i32, i32
  }
  func.func @transform_2(%arg0: i32, %arg1: i32, %arg2: i32) -> (i32, i32) {
    %c0_i32 = arith.constant 0 : i32
    %c0_i32_0 = arith.constant 0 : i32
    %c0_i32_1 = arith.constant 0 : i32
    return %c0_i32, %c0_i32_0 : i32, i32
  }
  func.func @transform_3(%arg0: i32, %arg1: i32, %arg2: i32) -> (i32, i32, i32, i32) {
    %c0_i32 = arith.constant 0 : i32
    %c0_i32_0 = arith.constant 0 : i32
    %c0_i32_1 = arith.constant 0 : i32
    return %arg0, %arg1, %c0_i32, %c0_i32_0 : i32, i32, i32, i32
  }
}

</mosaic_0001>

<llo_original>
// kernel: tpu_custom_call.1
$region0: #{tpu_custom_call.1}
  #allocation0 [shape = 'u32[]', space=smem, size = 0x4, offset = 0x4, fixed_abs, tag = 'smem constant byte address 0x4 - core index']
  #allocation1 [shape = 'u32[144,128]{1,0:T(1,128)}', space=vmem, size = 0x12000, scoped, tag = 'internal scratch']
  #allocation2 [shape = 'f32[4,128]{1,0:T(4,128)}', space=vmem, size = 0x800, scoped, tag = 'scratch operand']
  %s0 = inlined_call_operand.hbm [shape: f32[2,3,4,128], index: 0, kind: input, shape index: {}]
  %s1 = inlined_call_operand.hbm [shape: f32[2,3,4,128], index: 1, kind: input, shape index: {}]
  %s2 = inlined_call_operand.vmem [shape: f32[4,128], index: 2, kind: input, shape index: {}]
  %s3 = inlined_call_operand.hbm [shape: f32[2,1,1,128], index: 3, kind: output, shape index: {}]
  %s4 = sld [smem:[#allocation0]]
  $region61: #{tpu_custom_call.1} parent=0
    _
  %s6 = ssub.s32 1, %s4
  %s7 = scalar_select 0, %s6, %s4
  $region1: #{tpu_custom_call.1} parent=0
    #allocation3 [shape = 'u8[12288]{0}', space=vmem, size = 0x3000, scoped, tag = 'input window, operand 0']
    #allocation4 [shape = 's32[2]{0}', space=sflag, size = 0x8, scoped, tag = 'scoped memory for tpu_custom_call.1']
    #allocation5 [shape = 's32[2]{0}', space=sflag, size = 0x8, scoped, tag = 'scoped memory for tpu_custom_call.1']
    #allocation6 [shape = 'u8[12288]{0}', space=vmem, size = 0x3000, scoped, tag = 'input window, operand 1']
    #allocation7 [shape = 's32[2]{0}', space=sflag, size = 0x8, scoped, tag = 'scoped memory for tpu_custom_call.1']
    #allocation8 [shape = 'u8[1024]{0}', space=vmem, size = 0x400, scoped, tag = 'output window, operand 0']
    %8 = vsyncpa [#allocation4], 0
    %s9 = scalar_lea.sflag [#allocation4], 1
    %10 = vsyncpa %s9, 0
    %11 = vsyncpa [#allocation7], 0
    %s12 = scalar_lea.sflag [#allocation7], 1
    %13 = vsyncpa %s12, 0
    %14 = vsyncpa [#allocation5], 0
    %s15 = scalar_lea.sflag [#allocation5], 1
    %16 = vsyncpa %s15, 0
    loop: start=0, step=1, limit=4
    $region2: #{tpu_custom_call.1} parent=1 // loop_pre_header
      _
    $region3: #{tpu_custom_call.1} parent=1 // loop_header
      %s18 = sphi 0, %s22
      %p19 = scmp.ge.s32.totalorder %s18, 4
      %s25 = sphi 0, %s44
      %s26 = sphi 0, %s40
      %s27 = sphi 0, %s36
      %s28 = sphi 0, %s25
      %s29 = sphi 0, %s26
      %s30 = sphi 0, %s27
      %s31 = sphi 0, %s28
      %s32 = sphi 0, %s29
      %s33 = sphi 0, %s30
      %s51 = sphi 0, %s53
      %s54 = sphi 0, %s51
      %s55 = sphi 0, %s54
      %s71 = sphi 0, %s55
      %s81 = sphi 0, %s83
      %s84 = sphi 0, %s81
      %s85 = sphi 0, %s84
      %s101 = sphi 0, %s85
      %s105 = sphi 0, %s105
      %s107 = sphi 0, %s105
      %s108 = sphi 0, %s107
      %s122 = sphi 0, %s108
      %s130 = sphi 0, %s132
      %s133 = sphi 0, %s130
      %s134 = sphi 0, %s133
      %s150 = sphi 0, %s134
    $region4: #{tpu_custom_call.1} parent=1 // loop_header_branch
      %21 = sbr.rel (%p19) target = $region8
    $region5: #{tpu_custom_call.1} parent=1 // loop_body
      %s23 = ssub.s32 %s18, 1
      %s24 = ssub.s32 %s18, 2
      %s34 = sadd.s32 1, %s27
      %p35 = scmp.ge.s32.totalorder %s34, 1
      %s36 = scalar_select %p35, 0, %s34
      %s37 = sadd.s32 1, %s26
      %s38 = scalar_select %p35, %s37, %s26
      %p39 = scmp.ge.s32.totalorder %s38, 1
      %s40 = scalar_select %p39, 0, %s38
      %s41 = sadd.s32 1, %s25
      %s42 = scalar_select %p39, %s41, %s25
      %p43 = scmp.ge.s32.totalorder %s42, 2
      %s44 = scalar_select %p43, 0, %s42
      %s45 = sadd.s32 %s26, %s27
      %s46 = sadd.s32 %s40, %s36
      %s47 = ssub.s32 %s25, %s44
      %s48 = ssub.s32 %s45, %s46
      %s49 = sor.u32 %s47, %s48
      %p50 = scmp.eq.s32.totalorder %s49, 0
      %s52 = sadd.s32 %s51, 1
      %s53 = scalar_select %p50, %s51, %s52
      %p56 = pneg %p50
      %p57 = scmp.eq.s32.totalorder %s18, 1
      %p58 = por %p56, %p57
      %p59 = scmp.ne.s32.totalorder %s51, %s54
      %p60 = scmp.eq.s32.totalorder %s18, 0
      %p61 = por %p59, %p60
      %p62 = scmp.ne.s32.totalorder %s51, %s54
      %p63 = scmp.eq.s32.totalorder %s23, 1
      %p64 = por %p62, %p63
      %p65 = scmp.ne.s32.totalorder %s54, %s55
      %p66 = scmp.eq.s32.totalorder %s23, 0
      %p67 = por %p65, %p66
      %p68 = scmp.ne.s32.totalorder %s54, %s55
      %p69 = scmp.eq.s32.totalorder %s24, 1
      %p70 = por %p68, %p69
      %p72 = scmp.ne.s32.totalorder %s55, %s71
      %p73 = scmp.eq.s32.totalorder %s24, 0
      %p74 = por %p72, %p73
      %s75 = sadd.s32 %s26, %s27
      %s76 = sadd.s32 %s40, %s36
      %s77 = ssub.s32 %s25, %s44
      %s78 = ssub.s32 %s75, %s76
      %s79 = sor.u32 %s77, %s78
      %p80 = scmp.eq.s32.totalorder %s79, 0
      %s82 = sadd.s32 %s81, 1
      %s83 = scalar_select %p80, %s81, %s82
      %p86 = pneg %p80
      %p87 = scmp.eq.s32.totalorder %s18, 1
      %p88 = por %p86, %p87
      %p89 = scmp.ne.s32.totalorder %s81, %s84
      %p90 = scmp.eq.s32.totalorder %s18, 0
      %p91 = por %p89, %p90
      %p92 = scmp.ne.s32.totalorder %s81, %s84
      %p93 = scmp.eq.s32.totalorder %s23, 1
      %p94 = por %p92, %p93
      %p95 = scmp.ne.s32.totalorder %s84, %s85
      %p96 = scmp.eq.s32.totalorder %s23, 0
      %p97 = por %p95, %p96
      %p98 = scmp.ne.s32.totalorder %s84, %s85
      %p99 = scmp.eq.s32.totalorder %s24, 1
      %p100 = por %p98, %p99
      %p102 = scmp.ne.s32.totalorder %s85, %s101
      %p103 = scmp.eq.s32.totalorder %s24, 0
      %p104 = por %p102, %p103
      %s106 = sadd.s32 %s105, 1
      %p109 = scmp.eq.s32.totalorder %s18, 1
      %p110 = scmp.ne.s32.totalorder %s105, %s107
      %p111 = scmp.eq.s32.totalorder %s18, 0
      %p112 = por %p110, %p111
      %p113 = scmp.ne.s32.totalorder %s105, %s107
      %p114 = scmp.eq.s32.totalorder %s23, 1
      %p115 = por %p113, %p114
      %p116 = scmp.ne.s32.totalorder %s107, %s108
      %p117 = scmp.eq.s32.totalorder %s23, 0
      %p118 = por %p116, %p117
      %p119 = scmp.ne.s32.totalorder %s107, %s108
      %p120 = scmp.eq.s32.totalorder %s24, 1
      %p121 = por %p119, %p120
      %p123 = scmp.ne.s32.totalorder %s108, %s122
      %p124 = scmp.eq.s32.totalorder %s24, 0
      %p125 = por %p123, %p124
      %s126 = ssub.s32 %s25, %s44
      %s127 = ssub.s32 %s26, %s40
      %s128 = sor.u32 %s126, %s127
      %p129 = scmp.eq.s32.totalorder %s128, 0
      %s131 = sadd.s32 %s130, 1
      %s132 = scalar_select %p129, %s130, %s131
      %p135 = pneg %p129
      %p136 = scmp.eq.s32.totalorder %s18, 1
      %p137 = por %p135, %p136
      %p138 = scmp.ne.s32.totalorder %s130, %s133
      %p139 = scmp.eq.s32.totalorder %s18, 0
      %p140 = por %p138, %p139
      %p141 = scmp.ne.s32.totalorder %s130, %s133
      %p142 = scmp.eq.s32.totalorder %s23, 1
      %p143 = por %p141, %p142
      %p144 = scmp.ne.s32.totalorder %s133, %s134
      %p145 = scmp.eq.s32.totalorder %s23, 0
      %p146 = por %p144, %p145
      %p147 = scmp.ne.s32.totalorder %s133, %s134
      %p148 = scmp.eq.s32.totalorder %s24, 1
      %p149 = por %p147, %p148
      %p151 = scmp.ne.s32.totalorder %s134, %s150
      %p152 = scmp.eq.s32.totalorder %s24, 0
      %p153 = por %p151, %p152
      %p154 = scmp.le.s32.totalorder 1, %s18
      %p155 = scmp.lt.s32.totalorder %s18, 3
      %p156 = pnand %p154, %p155
      %p157 = pneg %p156
      // Predicated region
      $region9: #{tpu_custom_call.1} parent=5 // pred_check
        _
      $region10: #{tpu_custom_call.1} parent=5 // pred_check_branch
        %159 = sbr.rel (%p156) target = $region12
      $region11: #{tpu_custom_call.1} parent=5 // pred_region
        %s160 = ssub.s32 %s18, 1
        // Predicated region
        $region13: #{tpu_custom_call.1} parent=11 // pred_check
          %p161 = pneg %p118
        $region14: #{tpu_custom_call.1} parent=11 // pred_check_branch
          %163 = sbr.rel (%p161) target = $region16
        $region15: #{tpu_custom_call.1} parent=11 // pred_region
          _
        $region16: #{tpu_custom_call.1} parent=11 // pred_fallthru
          _
      $region12: #{tpu_custom_call.1} parent=5 // pred_fallthru
        _
      %p164 = scmp.lt.s32.totalorder %s18, 2
      // Predicated region
      $region17: #{tpu_custom_call.1} parent=5 // pred_check
        %p165 = pneg %p164
      $region18: #{tpu_custom_call.1} parent=5 // pred_check_branch
        %167 = sbr.rel (%p165) target = $region20
      $region19: #{tpu_custom_call.1} parent=5 // pred_region
        // Predicated region
        $region21: #{tpu_custom_call.1} parent=19 // pred_check
          %p168 = pneg %p61
        $region22: #{tpu_custom_call.1} parent=19 // pred_check_branch
          %170 = sbr.rel (%p168) target = $region24
        $region23: #{tpu_custom_call.1} parent=19 // pred_region
          %s171 = sand.u32 %s51, 1
          %s172 = scalar_lea.sflag [#allocation4], %s171
          %s173 = sand.u32 %s51, 1
          %s174 = smul.addr %s173, 12
          %s175 = scalar_lea.vmem [#allocation3], %s174
          %s176 = sadd.s32 %s26, %s27
          %s178 = ssub.s32 192, 192
          %179 = vsyncadd %s172, %s178
          %s180 = smul.addr %s25, 3
          %s181 = sadd.s32 %s176, %s180
          %s182 = smul.addr %s181, 64
          %s183 = scalar_lea.hbm %s0, %s182
          %s184 = sshll.u32 %s175, 4
          %s185 = int_to_ptr.vmem [resolvable:$true] %s184
          %190 = dma.hbm_to_vmem [thread:$0]  %s183, 192, %s185, %s172, 64, 64, 4
        $region24: #{tpu_custom_call.1} parent=19 // pred_fallthru
          _
        // Predicated region
        $region25: #{tpu_custom_call.1} parent=19 // pred_check
          %p191 = pneg %p91
        $region26: #{tpu_custom_call.1} parent=19 // pred_check_branch
          %193 = sbr.rel (%p191) target = $region28
        $region27: #{tpu_custom_call.1} parent=19 // pred_region
          %s194 = sand.u32 %s81, 1
          %s195 = scalar_lea.sflag [#allocation7], %s194
          %s196 = sand.u32 %s81, 1
          %s197 = smul.addr %s196, 12
          %s198 = scalar_lea.vmem [#allocation6], %s197
          %s199 = sadd.s32 %s26, %s27
          %s201 = ssub.s32 192, 192
          %202 = vsyncadd %s195, %s201
          %s203 = smul.addr %s25, 3
          %s204 = sadd.s32 %s199, %s203
          %s205 = smul.addr %s204, 64
          %s206 = scalar_lea.hbm %s1, %s205
          %s207 = sshll.u32 %s198, 4
          %s208 = int_to_ptr.vmem [resolvable:$true] %s207
          %213 = dma.hbm_to_vmem [thread:$0]  %s206, 192, %s208, %s195, 64, 64, 4
        $region28: #{tpu_custom_call.1} parent=19 // pred_fallthru
          _
      $region20: #{tpu_custom_call.1} parent=5 // pred_fallthru
        _
      %p214 = scmp.le.s32.totalorder 1, %s18
      %p215 = scmp.lt.s32.totalorder %s18, 3
      %p216 = pnand %p214, %p215
      %p217 = pneg %p216
      // Predicated region
      $region29: #{tpu_custom_call.1} parent=5 // pred_check
        _
      $region30: #{tpu_custom_call.1} parent=5 // pred_check_branch
        %219 = sbr.rel (%p216) target = $region32
      $region31: #{tpu_custom_call.1} parent=5 // pred_region
        %s220 = ssub.s32 %s18, 1
        %s221 = sand.u32 %s54, 1
        %s222 = scalar_lea.sflag [#allocation4], %s221
        %s223 = sand.u32 %s54, 1
        %s224 = smul.addr %s223, 12
        %s225 = scalar_lea.vmem [#allocation3], %s224
        // Predicated region
        $region33: #{tpu_custom_call.1} parent=31 // pred_check
          %p226 = pneg %p67
        $region34: #{tpu_custom_call.1} parent=31 // pred_check_branch
          %228 = sbr.rel (%p226) target = $region36
        $region35: #{tpu_custom_call.1} parent=31 // pred_region
          %229 = dma.done %s222, 192
        $region36: #{tpu_custom_call.1} parent=31 // pred_fallthru
          _
        %s230 = sand.u32 %s84, 1
        %s231 = scalar_lea.sflag [#allocation7], %s230
        %s232 = sand.u32 %s84, 1
        %s233 = smul.addr %s232, 12
        %s234 = scalar_lea.vmem [#allocation6], %s233
        // Predicated region
        $region37: #{tpu_custom_call.1} parent=31 // pred_check
          %p235 = pneg %p97
        $region38: #{tpu_custom_call.1} parent=31 // pred_check_branch
          %237 = sbr.rel (%p235) target = $region40
        $region39: #{tpu_custom_call.1} parent=31 // pred_region
          %238 = dma.done %s231, 192
        $region40: #{tpu_custom_call.1} parent=31 // pred_fallthru
          _
        %s239 = sand.u32 %s54, 1
        %s240 = scalar_lea.sflag [#allocation4], %s239
        %s241 = sand.u32 %s54, 1
        %s242 = smul.addr %s241, 12
        %s243 = scalar_lea.vmem [#allocation3], %s242
        %p244 = pneg %p67
        %p245 = pneg %p64
        %s246 = sand.u32 %s84, 1
        %s247 = scalar_lea.sflag [#allocation7], %s246
        %s248 = sand.u32 %s84, 1
        %s249 = smul.addr %s248, 12
        %s250 = scalar_lea.vmem [#allocation6], %s249
        %p251 = pneg %p97
        %p252 = pneg %p94
        %p253 = pneg %p118
        %p254 = pneg %p115
        %p255 = pneg %p146
        %p256 = pneg %p143
        %s257 = sand.u32 %s133, 1
        %s258 = scalar_lea.sflag [#allocation5], %s257
        %s259 = sand.u32 %s133, 1
        %s260 = scalar_lea.vmem [#allocation8], %s259
        %s261 = sadd.s32 %s29, %s30
        %s262 = sadd.s32 %s29, %s30
        %p263 = scmp.eq.s32.totalorder %s30, 0
        // Predicated region
        $region41: #{tpu_custom_call.1} parent=31 // pred_check
          %p264 = pneg %p263
        $region42: #{tpu_custom_call.1} parent=31 // pred_check_branch
          %266 = sbr.rel (%p264) target = $region44
        $region43: #{tpu_custom_call.1} parent=31 // pred_region
          %267 = vst [vmem:[#allocation2] sm:$0xf] 0.0
        $region44: #{tpu_custom_call.1} parent=31 // pred_fallthru
          _
        %v268 = vld [vmem:[%s225] sm:$0xf]
        %v269 = vld [vmem:[%s225 + $0x4] sm:$0xf]
        %v270 = vld [vmem:[%s225 + $0x8] sm:$0xf]
        %v271 = vld [vmem:[%s234] sm:$0xf]
        %v272 = vld [vmem:[%s234 + $0x4] sm:$0xf]
        %v273 = vld [vmem:[%s234 + $0x8] sm:$0xf]
        %v274 = vmul.f32 %v268, %v268
        %v275 = vmul.f32 %v269, %v269
        %v276 = vmul.f32 %v270, %v270
        %vm277 = vcmask 1043456
        %v278 = vsel %vm277, %v274, 0.0
        %v279 = vsel %vm277, %v275, 0.0
        %v280 = vadd.f32 %v278, %v279
        %v281 = vsel %vm277, %v276, 0.0
        %v282 = vadd.f32 %v280, %v281
        %v283 = vmul.f32 %v271, %v271
        %v284 = vmul.f32 %v272, %v272
        %v285 = vmul.f32 %v273, %v273
        %v286 = vsel %vm277, %v283, 0.0
        %v287 = vsel %vm277, %v284, 0.0
        %v288 = vadd.f32 %v286, %v287
        %v289 = vsel %vm277, %v285, 0.0
        %v290 = vadd.f32 %v288, %v289
        %v291 = vmul.f32 %v268, %v271
        %v292 = vmul.f32 %v269, %v272
        %v293 = vmul.f32 %v270, %v273
        %v294 = vsel %vm277, %v291, 0.0
        %v295 = vsel %vm277, %v292, 0.0
        %v296 = vadd.f32 %v294, %v295
        %v297 = vsel %vm277, %v293, 0.0
        %v298 = vadd.f32 %v296, %v297
        %v299 = vmax.f32 %v282, 1e-16
        %v300 = vmax.f32 %v290, 1e-16
        %v301 = vmul.f32 %v299, %v300
        %v302 = vrsqrt.pop %v301
        %v303 = vmul.f32 %v298, 0.999998
        %v304 = vmul.f32 %v303, %v302
        %v305 = vand.u32 2147483647, %v304
        %v306 = vmul.f32 %v305, -0.0012624911
        %v307 = vadd.f32 %v306, 0.00667009
        %v308 = vmul.f32 %v307, %v305
        %v309 = vadd.f32 %v308, -0.017088126
        %v310 = vmul.f32 %v309, %v305
        %v311 = vadd.f32 %v310, 0.03089188
        %v312 = vmul.f32 %v311, %v305
        %v313 = vadd.f32 %v312, -0.050174303
        %v314 = vmul.f32 %v313, %v305
        %v315 = vadd.f32 %v314, 0.08897899
        %v316 = vmul.f32 %v315, %v305
        %v317 = vadd.f32 %v316, -0.2145988
        %v318 = vmul.f32 %v317, %v305
        %v319 = vadd.f32 %v318, 1.5707963
        %v320 = vsub.f32 1.0, %v305
        %v321 = vmax.f32 %v320, 0.0
        %v322 = vrsqrt.pop %v321
        %v323 = vmul.f32 %v321, %v322
        %vm324 = vcmp.eq.f32.partialorder %v321, inf
        %v325 = vsel %vm324, %v321, %v323
        %vm326 = vcmp.eq.f32.partialorder %v321, 0.0
        %v327 = vand.u32 %v321, 2147483648
        %v328 = vsel %vm326, %v327, %v325
        %v329 = vmul.f32 %v328, %v319
        %vm330 = vcmp.lt.f32.partialorder %v304, 0.0
        %v331 = vsub.f32 3.1415927, %v329
        %v332 = vsel %vm330, %v331, %v329
        %v333 = vmul.f32 %v332, %v332
        %v334 = vld [vmem:[%s2] sm:$0xf]
        %v335 = vmul.f32 %v333, %v334
        %v336 = vld [vmem:[#allocation2] sm:$0xf]
        %v337 = vadd.f32 %v336, %v335
        %338 = vst [vmem:[#allocation2] sm:$0xf] %v337
        // Predicated region
        $region45: #{tpu_custom_call.1} parent=31 // pred_check
          %p339 = pneg %p263
        $region46: #{tpu_custom_call.1} parent=31 // pred_check_branch
          %341 = sbr.rel (%p339) target = $region48
        $region47: #{tpu_custom_call.1} parent=31 // pred_region
          %v342 = vld [vmem:[#allocation2] sm:$0xf]
          %v343 = vsel %vm277, %v342, 0.0
          %v344 = vrot.slane %v343, 4
          %v345 = vadd.f32 %v343, %v344
          %v346 = vrot.slane %v345, 2
          %v347 = vadd.f32 %v345, %v346
          %v348 = vrot.slane %v347, 1
          %v349 = vadd.f32 %v347, %v348
          %350 = vst [vmem:[%s260] sm:$0x1] %v349
        $region48: #{tpu_custom_call.1} parent=31 // pred_fallthru
          _
        %s351 = sand.u32 %s133, 1
        %s352 = scalar_lea.sflag [#allocation5], %s351
        %s353 = sand.u32 %s133, 1
        %s354 = scalar_lea.vmem [#allocation8], %s353
        // Predicated region
        $region49: #{tpu_custom_call.1} parent=31 // pred_check
          %p355 = pneg %p143
        $region50: #{tpu_custom_call.1} parent=31 // pred_check_branch
          %357 = sbr.rel (%p355) target = $region52
        $region51: #{tpu_custom_call.1} parent=31 // pred_region
          %s359 = ssub.s32 16, 16
          %360 = vsyncadd %s352, %s359
          %s361 = sadd.s32 %s29, %s28
          %s362 = smul.addr %s361, 16
          %s363 = scalar_lea.hbm %s3, %s362
          %s365 = sshll.u32 %s354, 4
          %s366 = int_to_ptr.vmem [resolvable:$true] %s365
          %368 = dma.vmem_to_hbm [thread:$0]  %s366, 16, %s363, %s352
        $region52: #{tpu_custom_call.1} parent=31 // pred_fallthru
          _
      $region32: #{tpu_custom_call.1} parent=5 // pred_fallthru
        _
      %p369 = scmp.le.s32.totalorder 2, %s18
      // Predicated region
      $region53: #{tpu_custom_call.1} parent=5 // pred_check
        %p370 = pneg %p369
      $region54: #{tpu_custom_call.1} parent=5 // pred_check_branch
        %372 = sbr.rel (%p370) target = $region56
      $region55: #{tpu_custom_call.1} parent=5 // pred_region
        %s373 = ssub.s32 %s18, 2
        // Predicated region
        $region57: #{tpu_custom_call.1} parent=55 // pred_check
          %p374 = pneg %p149
        $region58: #{tpu_custom_call.1} parent=55 // pred_check_branch
          %376 = sbr.rel (%p374) target = $region60
        $region59: #{tpu_custom_call.1} parent=55 // pred_region
          %s377 = sand.u32 %s134, 1
          %s378 = scalar_lea.sflag [#allocation5], %s377
          %s379 = sand.u32 %s134, 1
          %s380 = scalar_lea.vmem [#allocation8], %s379
          %381 = dma.done %s378, 16
        $region60: #{tpu_custom_call.1} parent=55 // pred_fallthru
          _
      $region56: #{tpu_custom_call.1} parent=5 // pred_fallthru
        _
    $region6: #{tpu_custom_call.1} parent=1 // loop_footer
      %s22 = sadd.s32 1, %s18
    $region7: #{tpu_custom_call.1} parent=1 // loop_footer_branch
      %17 = sbr.rel target = $region3
    $region8: #{tpu_custom_call.1} parent=1 // loop_exit
      _
    %382 = vsyncpa [#allocation4], 1
    %s383 = scalar_lea.sflag [#allocation4], 1
    %384 = vsyncpa %s383, 1
    %385 = vsyncpa [#allocation7], 1
    %s386 = scalar_lea.sflag [#allocation7], 1
    %387 = vsyncpa %s386, 1
    %388 = vsyncpa [#allocation5], 1
    %s389 = scalar_lea.sflag [#allocation5], 1
    %390 = vsyncpa %s389, 1

</llo_original>
